<compile_context>
chip_gen: v5e
topology: v5e:2x2
jax: 0.10.0
libtpu: 0.0.40
codegen_flags: <defaults>
</compile_context>

<pallas_src>
import functools

import jax
import jax.numpy as jnp
from jax.experimental import pallas as pl
from jax.experimental.pallas import tpu as pltpu


def _sap_kernel(x_ref, w_ref, b_ref, o_ref, *, block_n, seq_len):
    """One grid step processes `block_n` samples.

    x_ref: (block_n*seq_len, H) VMEM   w_ref: (H, 1) VMEM (resident across grid)
    b_ref: (1, 1) SMEM scalar          o_ref: (block_n, H) VMEM
    """
    x = x_ref[...]                                                    # native dtype

    # Scores for every row of the block with ONE fused tall-skinny MXU dot (f32 accum),
    # then bias (SMEM scalar) + ReLU.  Replaces block_n separate width-1 dots.
    s = jnp.dot(x, w_ref[...], preferred_element_type=jnp.float32)    # (block_n*T, 1)
    s = jnp.maximum(s + b_ref[0, 0], 0.0)

    # Per-sample numerically stable softmax over T and weighted reduction over T.
    # Softmax normalization is folded into one reciprocal on the (1, H) accumulator.
    for i in range(block_n):                                          # static unroll
        t0 = i * seq_len
        s_i = s[t0:t0 + seq_len, :]                                   # (T, 1) f32
        m = jnp.max(s_i, axis=0, keepdims=True)                       # (1, 1)
        e = jnp.exp(s_i - m)                                          # (T, 1)
        z = jnp.sum(e, axis=0, keepdims=True)                         # (1, 1)
        x_i = x_ref[pl.ds(t0, seq_len), :].astype(jnp.float32)        # (T, H)
        acc = jnp.sum(x_i * e, axis=0, keepdims=True)                 # (1, H) un-normalized
        o_ref[pl.ds(i, 1), :] = (acc * pl.reciprocal(z, approx=False)).astype(o_ref.dtype)


def self_attention_pooling(x, w, b, *, block_n=None):
    """x: (N, T, H); w: (H, 1) (transposed nn.Linear weight); b: (1, 1). Returns (N, H)."""
    N, T, H = x.shape
    itemsize = jnp.dtype(x.dtype).itemsize
    per_sample_bytes = T * H * itemsize

    if block_n is None:
        # ~8 MiB of x per pipelined input buffer; Pallas double-buffers it, so ~16 MiB of
        # x in flight — comfortably under the 48 MiB scoped-VMEM limit set below on every
        # TPU generation (including v7x's 64 MiB physical VMEM).
        budget_bytes = 8 * 1024 * 1024
        block_n = max(1, min(N, budget_bytes // max(per_sample_bytes, 1)))
    block_n = int(min(block_n, N))
    while N % block_n != 0:            # keep the grid exact (no padded trailing block)
        block_n -= 1

    # Free, contiguous 2-D view of x: rows [i*T, (i+1)*T) belong to sample i.  This lets
    # the kernel run the score Linear as one fused (block_n*T, H) @ (H, 1) matmul.
    x2 = x.reshape(N * T, H)

    kernel = functools.partial(_sap_kernel, block_n=block_n, seq_len=T)
    return pl.pallas_call(
        kernel,
        out_shape=jax.ShapeDtypeStruct((N, H), x.dtype),
        grid_spec=pltpu.PrefetchScalarGridSpec(
            num_scalar_prefetch=0,
            grid=(N // block_n,),
            in_specs=[
                # block_n samples worth of rows per step: one large contiguous DMA.
                pl.BlockSpec((block_n * T, H), lambda i: (i, 0)),
                # (H, 1) score weight: constant index_map -> stays resident in VMEM.
                pl.BlockSpec((H, 1), lambda i: (0, 0)),
                # Scalar bias: whole (1, 1) array lives in SMEM.
                pl.BlockSpec(memory_space=pltpu.MemorySpace.SMEM),
            ],
            out_specs=pl.BlockSpec((block_n, H), lambda i: (i, 0)),
        ),
        compiler_params=pltpu.CompilerParams(
            # Batch-block axis is embarrassingly parallel -> sharded across TensorCores
            # on multi-TC parts (v7x); no-op on single-TC v5e/v6e.
            dimension_semantics=("parallel",),
            vmem_limit_bytes=48 * 1024 * 1024,
        ),
    )(x2, w, b)


def _reference(x, w, b):
    scores = jnp.maximum(jnp.einsum("nth,ho->nto", x, w) + b[0, 0], 0.0)[..., 0]  # (N, T)
    att = jax.nn.softmax(scores, axis=1)[..., None]                               # (N, T, 1)
    return jnp.sum(x * att, axis=1)                                               # (N, H)


if __name__ == "__main__":
    N, T, H = 2, 8, 32

    key = jax.random.PRNGKey(0)
    kx, kw, kb = jax.random.split(key, 3)

    x = jax.random.normal(kx, (N, T, H), dtype=jnp.float32)
    # nn.Linear(input_dim, 1): weight (1, H), bias (1,); default uniform init.
    bound = 1.0 / jnp.sqrt(jnp.float32(H))
    w = jax.random.uniform(kw, (H, 1), jnp.float32, -bound, bound)   # transposed weight
    b = jax.random.uniform(kb, (1, 1), jnp.float32, -bound, bound)   # bias as (1, 1)

    out = jax.block_until_ready(self_attention_pooling(x, w, b))
    ref = _reference(x, w, b)
    assert out.shape == (N, H)
    assert jnp.allclose(out, ref, atol=1e-5, rtol=1e-5), "mismatch vs reference"

    print("KERNEL_OK")
</pallas_src>

<mosaic_0001>
module attributes {stable_mosaic.version = 11 : i64} {
  func.func @_sap_kernel(%arg0: i32, %arg1: memref<16x32xf32, #tpu.memory_space<vmem>>, %arg2: memref<32x1xf32, #tpu.memory_space<vmem>>, %arg3: memref<1x1xf32, #tpu.memory_space<smem>>, %arg4: memref<2x32xf32, #tpu.memory_space<vmem>>) attributes {dimension_semantics = [#tpu.dimension_semantics<parallel>], iteration_bounds = array<i64: 1>, scalar_prefetch = 0 : i64, scratch_operands = 0 : i64, tpu.core_type = #tpu.core_type<tc>, window_params = [{transform_indices = @transform_0, window_bounds = array<i64: 16, 32>}, {pipeline_mode = #tpu.pipeline_mode<synchronous>, transform_indices = @transform_1, window_bounds = array<i64: 32, 1>}, {transform_indices = @transform_2, window_bounds = array<i64: 1, 1>}, {transform_indices = @transform_3, window_bounds = array<i64: 2, 32>}]} {
    %c0 = arith.constant 0 : index
    %c0_0 = arith.constant 0 : index
    %0 = vector.load %arg1[%c0, %c0_0] : memref<16x32xf32, #tpu.memory_space<vmem>>, vector<16x32xf32>
    %c0_1 = arith.constant 0 : index
    %c0_2 = arith.constant 0 : index
    %1 = vector.load %arg2[%c0_1, %c0_2] : memref<32x1xf32, #tpu.memory_space<vmem>>, vector<32x1xf32>
    %cst = arith.constant dense<0.000000e+00> : vector<16x1xf32>
    %2 = tpu.matmul %0, %1, %cst {dimension_numbers = #tpu.dot_dimension_numbers<[1], [0], [0], [1], [0, 0, 1, 1], [], []>} : vector<16x32xf32>, vector<32x1xf32>, vector<16x1xf32> -> vector<16x1xf32>
    %c0_3 = arith.constant 0 : index
    %c0_4 = arith.constant 0 : index
    %3 = memref.load %arg3[%c0_3, %c0_4] : memref<1x1xf32, #tpu.memory_space<smem>>
    %4 = vector.broadcast %3 : f32 to vector<16x1xf32>
    %5 = arith.addf %2, %4 : vector<16x1xf32>
    %cst_5 = arith.constant 0.000000e+00 : f32
    %6 = vector.broadcast %cst_5 : f32 to vector<16x1xf32>
    %7 = arith.maximumf %5, %6 : vector<16x1xf32>
    %8 = vector.extract_strided_slice %7 {offsets = [0, 0], sizes = [8, 1], strides = [1, 1]} : vector<16x1xf32> to vector<8x1xf32>
    %cst_6 = arith.constant dense<0xFF800000> : vector<1xf32>
    %9 = vector.multi_reduction <maximumf>, %8, %cst_6 [0] : vector<8x1xf32> to vector<1xf32>
    %10 = vector.shape_cast %9 : vector<1xf32> to vector<1x1xf32>
    %11 = vector.broadcast %10 : vector<1x1xf32> to vector<8x1xf32>
    %12 = arith.subf %8, %11 : vector<8x1xf32>
    %13 = math.exp %12 : vector<8x1xf32>
    %cst_7 = arith.constant dense<0.000000e+00> : vector<1xf32>
    %14 = vector.multi_reduction <add>, %13, %cst_7 [0] : vector<8x1xf32> to vector<1xf32>
    %15 = vector.shape_cast %14 : vector<1xf32> to vector<1x1xf32>
    %c0_8 = arith.constant 0 : index
    %c0_9 = arith.constant 0 : index
    %16 = vector.load %arg1[%c0_8, %c0_9] : memref<16x32xf32, #tpu.memory_space<vmem>>, vector<8x32xf32>
    %17 = vector.broadcast %13 : vector<8x1xf32> to vector<8x32xf32>
    %18 = arith.mulf %16, %17 : vector<8x32xf32>
    %cst_10 = arith.constant dense<0.000000e+00> : vector<32xf32>
    %19 = vector.multi_reduction <add>, %18, %cst_10 [0] : vector<8x32xf32> to vector<32xf32>
    %20 = vector.shape_cast %19 : vector<32xf32> to vector<1x32xf32>
    %21 = tpu.reciprocal %15 : vector<1x1xf32> -> vector<1x1xf32>
    %22 = vector.broadcast %21 : vector<1x1xf32> to vector<1x32xf32>
    %23 = arith.mulf %20, %22 : vector<1x32xf32>
    %c0_11 = arith.constant 0 : index
    %c0_12 = arith.constant 0 : index
    %24 = vector.load %arg4[%c0_11, %c0_12] : memref<2x32xf32, #tpu.memory_space<vmem>>, vector<1x32xf32>
    tpu.vector_store %arg4[%c0_11, %c0_12], %23 {strides = array<i32>} : memref<2x32xf32, #tpu.memory_space<vmem>>, vector<1x32xf32>,
    %25 = vector.extract_strided_slice %7 {offsets = [8, 0], sizes = [8, 1], strides = [1, 1]} : vector<16x1xf32> to vector<8x1xf32>
    %cst_13 = arith.constant dense<0xFF800000> : vector<1xf32>
    %26 = vector.multi_reduction <maximumf>, %25, %cst_13 [0] : vector<8x1xf32> to vector<1xf32>
    %27 = vector.shape_cast %26 : vector<1xf32> to vector<1x1xf32>
    %28 = vector.broadcast %27 : vector<1x1xf32> to vector<8x1xf32>
    %29 = arith.subf %25, %28 : vector<8x1xf32>
    %30 = math.exp %29 : vector<8x1xf32>
    %cst_14 = arith.constant dense<0.000000e+00> : vector<1xf32>
    %31 = vector.multi_reduction <add>, %30, %cst_14 [0] : vector<8x1xf32> to vector<1xf32>
    %32 = vector.shape_cast %31 : vector<1xf32> to vector<1x1xf32>
    %c8 = arith.constant 8 : index
    %c0_15 = arith.constant 0 : index
    %33 = vector.load %arg1[%c8, %c0_15] : memref<16x32xf32, #tpu.memory_space<vmem>>, vector<8x32xf32>
    %34 = vector.broadcast %30 : vector<8x1xf32> to vector<8x32xf32>
    %35 = arith.mulf %33, %34 : vector<8x32xf32>
    %cst_16 = arith.constant dense<0.000000e+00> : vector<32xf32>
    %36 = vector.multi_reduction <add>, %35, %cst_16 [0] : vector<8x32xf32> to vector<32xf32>
    %37 = vector.shape_cast %36 : vector<32xf32> to vector<1x32xf32>
    %38 = tpu.reciprocal %32 : vector<1x1xf32> -> vector<1x1xf32>
    %39 = vector.broadcast %38 : vector<1x1xf32> to vector<1x32xf32>
    %40 = arith.mulf %37, %39 : vector<1x32xf32>
    %c1 = arith.constant 1 : index
    %c0_17 = arith.constant 0 : index
    %41 = vector.load %arg4[%c1, %c0_17] : memref<2x32xf32, #tpu.memory_space<vmem>>, vector<1x32xf32>
    tpu.vector_store %arg4[%c1, %c0_17], %40 {strides = array<i32>} : memref<2x32xf32, #tpu.memory_space<vmem>>, vector<1x32xf32>,
    return
  }
  func.func @transform_0(%arg0: i32) -> (i32, i32) {
    %c0_i32 = arith.constant 0 : i32
    %c0_i32_0 = arith.constant 0 : i32
    return %arg0, %c0_i32 : i32, i32
  }
  func.func @transform_1(%arg0: i32) -> (i32, i32) {
    %c0_i32 = arith.constant 0 : i32
    %c0_i32_0 = arith.constant 0 : i32
    %c0_i32_1 = arith.constant 0 : i32
    return %c0_i32, %c0_i32_0 : i32, i32
  }
  func.func @transform_2(%arg0: i32) -> (i32, i32) {
    %c0_i32 = arith.constant 0 : i32
    %c0_i32_0 = arith.constant 0 : i32
    %c0_i32_1 = arith.constant 0 : i32
    return %c0_i32, %c0_i32_0 : i32, i32
  }
  func.func @transform_3(%arg0: i32) -> (i32, i32) {
    %c0_i32 = arith.constant 0 : i32
    %c0_i32_0 = arith.constant 0 : i32
    return %arg0, %c0_i32 : i32, i32
  }
}

</mosaic_0001>

<llo_original>
// kernel: tpu_custom_call.1
$region0: #{tpu_custom_call.1}
  #allocation0 [shape = 'u32[]', space=smem, size = 0x4, offset = 0x4, fixed_abs, tag = 'smem constant byte address 0x4 - core index']
  #allocation1 [shape = 'u32[72,128]{1,0:T(1,128)}', space=vmem, size = 0x9000, scoped, tag = 'internal scratch']
  #allocation2 [shape = 'f32[1,1]{1,0:T(1,128)S(6)}', space=smem, size = 0x200, scoped, tag = 'scoped memory for tpu_custom_call.1']
  %s0 = inlined_call_operand.vmem [shape: f32[16,32], index: 0, kind: input, shape index: {}]
  %s1 = inlined_call_operand.vmem [shape: f32[32,1], index: 1, kind: input, shape index: {}]
  %s2 = inlined_call_operand.<no memory space> [shape: f32[1,1], index: 2, kind: input, shape index: {}]
  %s3 = inlined_call_operand.hbm [shape: f32[2,32], index: 3, kind: output, shape index: {}]
  %s4 = sld [smem:[#allocation0]]
  $region22: #{tpu_custom_call.1} parent=0
    _
  %s6 = ssub.s32 1, %s4
  %s7 = scalar_select 0, %s6, %s4
  %8 = sst [smem:[#allocation2]] %s2
  $region1: #{tpu_custom_call.1} parent=0
    #allocation3 [shape = 'u8[1024]{0}', space=vmem, size = 0x400, scoped, tag = 'output window, operand 0, single buffered']
    #allocation4 [shape = 's32[1]{0}', space=sflag, size = 0x4, scoped, tag = 'scoped memory for tpu_custom_call.1']
    %9 = vsyncpa [#allocation4], 0
    // Predicated region
    $region2: #{tpu_custom_call.1} parent=1 // pred_check
      _
    $region3: #{tpu_custom_call.1} parent=1 // pred_check_branch
      %11 = sbr.rel (0) target = $region5
    $region4: #{tpu_custom_call.1} parent=1 // pred_region
      _
    $region5: #{tpu_custom_call.1} parent=1 // pred_fallthru
      _
    // Predicated region
    $region6: #{tpu_custom_call.1} parent=1 // pred_check
      _
    $region7: #{tpu_custom_call.1} parent=1 // pred_check_branch
      %13 = sbr.rel (0) target = $region9
    $region8: #{tpu_custom_call.1} parent=1 // pred_region
      _
    $region9: #{tpu_custom_call.1} parent=1 // pred_fallthru
      _
    // Predicated region
    $region10: #{tpu_custom_call.1} parent=1 // pred_check
      _
    $region11: #{tpu_custom_call.1} parent=1 // pred_check_branch
      %15 = sbr.rel (0) target = $region13
    $region12: #{tpu_custom_call.1} parent=1 // pred_region
      _
    $region13: #{tpu_custom_call.1} parent=1 // pred_fallthru
      _
    %v16 = vld [vmem:[%s0] sm:$0xff]
    %v17 = vld [vmem:[%s0 + $0x8] sm:$0xff]
    %v18 = vld [vmem:[%s1] sm:$0xff]
    %v19 = vld [vmem:[%s1 + $0x8] sm:$0xff]
    %v20 = vld [vmem:[%s1 + $0x10] sm:$0xff]
    %v21 = vld [vmem:[%s1 + $0x18] sm:$0xff]
    %s22 = sld [smem:[#allocation2]]
    %v23 = vstv %s22
    %vm24 = vcmask 261120
    %v26 = vsel %vm24, %v16, 0
    %v29 = vsel %vm24, %v17, 0
    %31 = vmatpush.msra.mxu0 0.0
    %32 = vmatpush.msra.mxu0 0.0
    %33 = vmatpush.msra.mxu0 0.0
    %34 = vmatpush.msra.mxu0 0.0
    %35 = vmatpush.msra.mxu0 0.0
    %36 = vmatpush.msra.mxu0 0.0
    %37 = vmatpush.msra.mxu0 0.0
    %38 = vmatpush.msra.mxu0 0.0
    %39 = vmatpush.msra.mxu0 0.0
    %40 = vmatpush.msra.mxu0 0.0
    %41 = vmatpush.msra.mxu0 0.0
    %42 = vmatpush.msra.mxu0 0.0
    %43 = vmatpush.msra.mxu0 %v21
    %44 = vmatpush.msra.mxu0 %v20
    %45 = vmatpush.msra.mxu0 %v19
    %46 = vmatpush.msra.mxu0 %v18
    %47 = vmatmul.f32.gmra.mxu0 %v26
    %v48 = vpop.f32.mrf.mxu0
    %v49 = vadd.f32 %v23, %v48
    %50 = vmatmul.f32.gmra.mxu0 %v29
    %v51 = vpop.f32.mrf.mxu0
    %v52 = vadd.f32 %v23, %v51
    %53 = vdwg.mxu0
    %v54 = vmax.f32 %v49, 0.0
    %v55 = vmax.f32 %v52, 0.0
    %vm56 = vcmask 7168
    %v57 = vsel %vm56, %v54, -inf
    %v58 = vrot.slane %v57, 4
    %v59 = vmax.f32 %v57, %v58
    %v60 = vrot.slane %v59, 2
    %v61 = vmax.f32 %v59, %v60
    %v62 = vrot.slane %v61, 1
    %v63 = vmax.f32 %v61, %v62
    %v64 = vsub.f32 %v54, %v63
    %v65 = vmul.f32 %v64, 1.442695
    %v66 = vpow.pop %v65
    %v67 = vsel %vm56, %v66, 0.0
    %v68 = vrot.slane %v67, 4
    %v69 = vadd.f32 %v67, %v68
    %v70 = vrot.slane %v69, 2
    %v71 = vadd.f32 %v69, %v70
    %v72 = vrot.slane %v71, 1
    %v73 = vadd.f32 %v71, %v72
    %v74 = vld [vmem:[%s0] sm:$0xff]
    %76 = vset.pattern.permute.xlu0 0
    %77 = vperm.xlu0 %76, %v66
    %v78 = vpop.permute.xlu0 %77
    %v80 = vmul.f32 %v74, %v78
    %v81 = vsel %vm24, %v80, 0.0
    %v82 = vrot.slane %v81, 4
    %v83 = vadd.f32 %v81, %v82
    %v84 = vrot.slane %v83, 2
    %v85 = vadd.f32 %v83, %v84
    %v86 = vrot.slane %v85, 1
    %v87 = vadd.f32 %v85, %v86
    %v88 = vrcp.pop %v73
    %v89 = vmul.f32 %v73, %v88
    %v90 = vsub.f32 1.0, %v89
    %v91 = vmul.f32 %v88, %v90
    %v92 = vadd.f32 %v88, %v91
    %vm93 = vweird.f32 %v73
    %vm94 = vweird.f32 %v88
    %vm95 = vmor %vm93, %vm94
    %v96 = vsel %vm95, %v88, %v92
    %v97 = vand.u32 2147483647, %v73
    %vm98 = vcmp.eq.f32.partialorder %v97, 8.507059e+37
    %v99 = vand.u32 %v73, 2147483648
    %v100 = vor.u32 1.1754944e-38, %v99
    %v101 = vsel %vm98, %v100, %v96
    %103 = vset.pattern.permute.xlu0 0
    %104 = vperm.xlu0 %103, %v101
    %v105 = vpop.permute.xlu0 %104
    %v107 = vmul.f32 %v87, %v105
    %vm108 = vcmask 253952
    %109 = vst.msk [vmem:[#allocation3] sm:$0x1] %vm108, %v107
    %v110 = vsel %vm56, %v55, -inf
    %v111 = vrot.slane %v110, 4
    %v112 = vmax.f32 %v110, %v111
    %v113 = vrot.slane %v112, 2
    %v114 = vmax.f32 %v112, %v113
    %v115 = vrot.slane %v114, 1
    %v116 = vmax.f32 %v114, %v115
    %v117 = vsub.f32 %v55, %v116
    %v118 = vmul.f32 %v117, 1.442695
    %v119 = vpow.pop %v118
    %v120 = vsel %vm56, %v119, 0.0
    %v121 = vrot.slane %v120, 4
    %v122 = vadd.f32 %v120, %v121
    %v123 = vrot.slane %v122, 2
    %v124 = vadd.f32 %v122, %v123
    %v125 = vrot.slane %v124, 1
    %v126 = vadd.f32 %v124, %v125
    %v127 = vld [vmem:[%s0 + $0x8] sm:$0xff]
    %129 = vset.pattern.permute.xlu0 0
    %130 = vperm.xlu0 %129, %v119
    %v131 = vpop.permute.xlu0 %130
    %v133 = vmul.f32 %v127, %v131
    %v134 = vsel %vm24, %v133, 0.0
    %v135 = vrot.slane %v134, 4
    %v136 = vadd.f32 %v134, %v135
    %v137 = vrot.slane %v136, 2
    %v138 = vadd.f32 %v136, %v137
    %v139 = vrot.slane %v138, 1
    %v140 = vadd.f32 %v138, %v139
    %v141 = vrcp.pop %v126
    %v142 = vmul.f32 %v126, %v141
    %v143 = vsub.f32 1.0, %v142
    %v144 = vmul.f32 %v141, %v143
    %v145 = vadd.f32 %v141, %v144
    %vm146 = vweird.f32 %v126
    %vm147 = vweird.f32 %v141
    %vm148 = vmor %vm146, %vm147
    %v149 = vsel %vm148, %v141, %v145
    %v150 = vand.u32 2147483647, %v126
    %vm151 = vcmp.eq.f32.partialorder %v150, 8.507059e+37
    %v152 = vand.u32 %v126, 2147483648
    %v153 = vor.u32 1.1754944e-38, %v152
    %v154 = vsel %vm151, %v153, %v149
    %156 = vset.pattern.permute.xlu0 0
    %157 = vperm.xlu0 %156, %v154
    %v158 = vpop.permute.xlu0 %157
    %v160 = vmul.f32 %v140, %v158
    %161 = vst.msk [vmem:[#allocation3 + $0x1] sm:$0x1] %vm108, %v160
    // Predicated region
    $region14: #{tpu_custom_call.1} parent=1 // pred_check
      _
    $region15: #{tpu_custom_call.1} parent=1 // pred_check_branch
      %163 = sbr.rel (0) target = $region17
    $region16: #{tpu_custom_call.1} parent=1 // pred_region
      %165 = vsyncadd [#allocation4], 0
      %s167 = sshll.u32 [#allocation3], 4
      %s168 = int_to_ptr.vmem [resolvable:$true] %s167
      %s169 = sshll.u32 %s3, 4
      %s170 = int_to_ptr.hbm [resolvable:$true] %s169
      %172 = dma.vmem_to_hbm [thread:$0]  %s168, 32, %s170, [#allocation4]
    $region17: #{tpu_custom_call.1} parent=1 // pred_fallthru
      _
    // Predicated region
    $region18: #{tpu_custom_call.1} parent=1 // pred_check
      _
    $region19: #{tpu_custom_call.1} parent=1 // pred_check_branch
      %174 = sbr.rel (0) target = $region21
    $region20: #{tpu_custom_call.1} parent=1 // pred_region
      %176 = dma.done [#allocation4], 32
    $region21: #{tpu_custom_call.1} parent=1 // pred_fallthru
      _
    %177 = vsyncpa [#allocation4], 1

</llo_original>
